<compile_context>
chip_gen: v6e
topology: v6e:2x2x1
jax: 0.10.0
libtpu: 0.0.40
codegen_flags: <defaults>
</compile_context>

<pallas_src>
import functools

import jax
import jax.numpy as jnp
import numpy as np
from jax.experimental import pallas as pl
from jax.experimental.pallas import tpu as pltpu


def _shortcut_kernel(x_ref, s_ref, o_ref, *, pad, c_in, exact_f32):
    """One batch block.

    x_ref: (n_tile, C, L)             only the real input channels, L = H*W
    s_ref: (L, L2)                    0/1 selection matrix (bf16), L2 = (H//2)*(W//2)
    o_ref: (n_tile, C + 2*pad, L2)    output block
    """
    n_tile, _, l = x_ref.shape
    l2 = o_ref.shape[2]

    # Padded channel ranges: direct zero stores, no HBM read, no mask math.
    if pad > 0:
        z = jnp.zeros((n_tile, pad, l2), o_ref.dtype)
        o_ref[:, :pad, :] = z
        o_ref[:, pad + c_in:, :] = z

    x = x_ref[...].reshape(n_tile * c_in, l)   # leading-dim merge (layout-trivial)
    s = s_ref[...]                             # bf16 0/1 selection matrix

    if exact_f32:
        # Exact 3-term bf16 split of f32 x: b0 + b1 + b2 == x bit-exactly and
        # each term is exactly bf16-representable, so three single-pass bf16
        # matmuls against the exact 0/1 selection matrix reproduce x exactly
        # (each output column selects exactly one input element).
        b0 = x.astype(jnp.bfloat16)
        r1 = x - b0.astype(jnp.float32)
        b1 = r1.astype(jnp.bfloat16)
        b2 = (r1 - b1.astype(jnp.float32)).astype(jnp.bfloat16)
        y = jnp.dot(b0, s, preferred_element_type=jnp.float32)
        y = y + jnp.dot(b1, s, preferred_element_type=jnp.float32)
        y = y + jnp.dot(b2, s, preferred_element_type=jnp.float32)
    else:
        # Low-precision inputs (e.g. bf16): one native single-pass matmul.
        y = jnp.dot(x, s, preferred_element_type=jnp.float32)

    o_ref[:, pad:pad + c_in, :] = y.reshape(n_tile, c_in, l2).astype(o_ref.dtype)


def _pick_n_tile(n, c_in, c_out, l, l2, itemsize, budget_bytes=16 << 20):
    """Largest batch tile whose working set stays within `budget_bytes`
    (comfortably under the raised scoped-VMEM limit on v5e/v6e/v7x), while
    keeping >= 2 grid steps so v7x's two TensorCores both get work."""
    sel_bytes = 2 * l * l2 * 2                          # bf16 sel, double-buffered
    blocks = 2 * (c_in * l + c_out * l2) * itemsize     # double-buffered in/out blocks
    scratch = 16 * c_in * l + 12 * c_in * l2            # split terms + f32 matmul result (upper bound)
    per_item = blocks + scratch
    avail = max(budget_bytes - sel_bytes, per_item)
    nt = max(1, min(n, avail // per_item))
    if n >= 2:
        nt = min(nt, max(1, n // 2))                    # >= 2 grid steps for megacore
    return int(min(nt, 256))                            # bound block / compile size


def lambda_shortcut(x, planes):
    """Pallas implementation of the resnet_cifar option-A shortcut lambda:
       F.pad(x[:, :, ::2, ::2], (0,0,0,0, planes//4, planes//4), 'constant', 0)"""
    N, C, H, W = x.shape
    assert H % 2 == 0 and W % 2 == 0
    pad = planes // 4
    c_out = C + 2 * pad
    H2, W2 = H // 2, W // 2
    L, L2 = H * W, H2 * W2

    # 0/1 selection matrix: output column i*W2 + j picks flattened input
    # element (2i)*W + (2j) (even row, even col).  Built once in numpy (glue);
    # 0/1 is exact in bf16.
    sel_np = np.zeros((L, L2), np.float32)
    rows = (2 * np.arange(H2)[:, None] * W + 2 * np.arange(W2)[None, :]).reshape(-1)
    sel_np[rows, np.arange(L2)] = 1.0
    sel = jnp.asarray(sel_np, dtype=jnp.bfloat16)

    exact_f32 = bool(x.dtype == jnp.float32)
    x_flat = x.reshape(N, C, L)                          # free view, lane dim = H*W
    n_tile = _pick_n_tile(N, C, c_out, L, L2, x.dtype.itemsize)
    grid = int(pl.cdiv(N, n_tile))                       # ragged tail masked by Pallas

    kernel = functools.partial(_shortcut_kernel, pad=pad, c_in=C, exact_f32=exact_f32)

    out_flat = pl.pallas_call(
        kernel,
        out_shape=jax.ShapeDtypeStruct((N, c_out, L2), x.dtype),
        grid=(grid,),
        in_specs=[
            pl.BlockSpec((n_tile, C, L), lambda n: (n, 0, 0)),
            pl.BlockSpec((L, L2), lambda n: (0, 0)),     # constant block -> fetched once
        ],
        out_specs=pl.BlockSpec((n_tile, c_out, L2), lambda n: (n, 0, 0)),
        compiler_params=pltpu.CompilerParams(
            dimension_semantics=("parallel",),           # batch blocks shard across TCs (v7x)
            vmem_limit_bytes=40 << 20),
    )(x_flat, sel)

    return out_flat.reshape(N, c_out, H2, W2)            # free view back to NCHW


if __name__ == "__main__":
    key = jax.random.PRNGKey(0)
    # Smallest real resnet_cifar stage transition: in_planes=16 -> planes=32.
    N, C, H, W = 4, 16, 16, 16
    planes = 2 * C
    pad = planes // 4

    x = jax.random.normal(key, (N, C, H, W), dtype=jnp.float32)

    y = jax.block_until_ready(lambda_shortcut(x, planes))

    # Pure-JAX reference of the PyTorch lambda:
    # F.pad(x[:, :, ::2, ::2], (0,0,0,0,pad,pad), "constant", 0)
    ref = jnp.zeros((N, C + 2 * pad, H // 2, W // 2), x.dtype)
    ref = ref.at[:, pad:pad + C].set(x[:, :, ::2, ::2])

    assert y.shape == ref.shape and y.dtype == ref.dtype
    np.testing.assert_allclose(np.asarray(y), np.asarray(ref),
                               rtol=1e-6, atol=1e-6)
    print("KERNEL_OK")
</pallas_src>

<mosaic_0001>
module attributes {stable_mosaic.version = 11 : i64} {
  func.func @_shortcut_kernel(%arg0: i32, %arg1: memref<2x16x256xf32, #tpu.memory_space<vmem>>, %arg2: memref<256x64xbf16, #tpu.memory_space<vmem>>, %arg3: memref<2x32x64xf32, #tpu.memory_space<vmem>>) attributes {dimension_semantics = [#tpu.dimension_semantics<parallel>], iteration_bounds = array<i64: 2>, scalar_prefetch = 0 : i64, scratch_operands = 0 : i64, tpu.core_type = #tpu.core_type<tc>, window_params = [{transform_indices = @transform_0, window_bounds = array<i64: 2, 16, 256>}, {pipeline_mode = #tpu.pipeline_mode<synchronous>, transform_indices = @transform_1, window_bounds = array<i64: 256, 64>}, {transform_indices = @transform_2, window_bounds = array<i64: 2, 32, 64>}]} {
    %cst = arith.constant 0.000000e+00 : f32
    %0 = vector.broadcast %cst : f32 to vector<2x8x64xf32>
    %c0 = arith.constant 0 : index
    %c0_0 = arith.constant 0 : index
    %c0_1 = arith.constant 0 : index
    %1 = vector.load %arg3[%c0, %c0_0, %c0_1] : memref<2x32x64xf32, #tpu.memory_space<vmem>>, vector<2x8x64xf32>
    tpu.vector_store %arg3[%c0, %c0_0, %c0_1], %0 {strides = array<i32>} : memref<2x32x64xf32, #tpu.memory_space<vmem>>, vector<2x8x64xf32>,
    %c0_2 = arith.constant 0 : index
    %c24 = arith.constant 24 : index
    %c0_3 = arith.constant 0 : index
    %2 = vector.load %arg3[%c0_2, %c24, %c0_3] : memref<2x32x64xf32, #tpu.memory_space<vmem>>, vector<2x8x64xf32>
    tpu.vector_store %arg3[%c0_2, %c24, %c0_3], %0 {strides = array<i32>} : memref<2x32x64xf32, #tpu.memory_space<vmem>>, vector<2x8x64xf32>,
    %c0_4 = arith.constant 0 : index
    %c0_5 = arith.constant 0 : index
    %c0_6 = arith.constant 0 : index
    %3 = vector.load %arg1[%c0_4, %c0_5, %c0_6] : memref<2x16x256xf32, #tpu.memory_space<vmem>>, vector<2x16x256xf32>
    %4 = vector.shape_cast %3 : vector<2x16x256xf32> to vector<32x256xf32>
    %c0_7 = arith.constant 0 : index
    %c0_8 = arith.constant 0 : index
    %5 = vector.load %arg2[%c0_7, %c0_8] : memref<256x64xbf16, #tpu.memory_space<vmem>>, vector<256x64xbf16>
    %6 = arith.truncf %4 : vector<32x256xf32> to vector<32x256xbf16>
    %7 = arith.extf %6 : vector<32x256xbf16> to vector<32x256xf32>
    %8 = arith.subf %4, %7 : vector<32x256xf32>
    %9 = arith.truncf %8 : vector<32x256xf32> to vector<32x256xbf16>
    %10 = arith.extf %9 : vector<32x256xbf16> to vector<32x256xf32>
    %11 = arith.subf %8, %10 : vector<32x256xf32>
    %12 = arith.truncf %11 : vector<32x256xf32> to vector<32x256xbf16>
    %cst_9 = arith.constant dense<0.000000e+00> : vector<32x64xf32>
    %13 = tpu.matmul %6, %5, %cst_9 {dimension_numbers = #tpu.dot_dimension_numbers<[1], [0], [0], [1], [0, 0, 1, 1], [], []>} : vector<32x256xbf16>, vector<256x64xbf16>, vector<32x64xf32> -> vector<32x64xf32>
    %cst_10 = arith.constant dense<0.000000e+00> : vector<32x64xf32>
    %14 = tpu.matmul %9, %5, %cst_10 {dimension_numbers = #tpu.dot_dimension_numbers<[1], [0], [0], [1], [0, 0, 1, 1], [], []>} : vector<32x256xbf16>, vector<256x64xbf16>, vector<32x64xf32> -> vector<32x64xf32>
    %15 = arith.addf %13, %14 : vector<32x64xf32>
    %cst_11 = arith.constant dense<0.000000e+00> : vector<32x64xf32>
    %16 = tpu.matmul %12, %5, %cst_11 {dimension_numbers = #tpu.dot_dimension_numbers<[1], [0], [0], [1], [0, 0, 1, 1], [], []>} : vector<32x256xbf16>, vector<256x64xbf16>, vector<32x64xf32> -> vector<32x64xf32>
    %17 = arith.addf %15, %16 : vector<32x64xf32>
    %18 = vector.shape_cast %17 : vector<32x64xf32> to vector<2x16x64xf32>
    %c0_12 = arith.constant 0 : index
    %c8 = arith.constant 8 : index
    %c0_13 = arith.constant 0 : index
    %19 = vector.load %arg3[%c0_12, %c8, %c0_13] : memref<2x32x64xf32, #tpu.memory_space<vmem>>, vector<2x16x64xf32>
    tpu.vector_store %arg3[%c0_12, %c8, %c0_13], %18 {strides = array<i32>} : memref<2x32x64xf32, #tpu.memory_space<vmem>>, vector<2x16x64xf32>,
    return
  }
  func.func @transform_0(%arg0: i32) -> (i32, i32, i32) {
    %c0_i32 = arith.constant 0 : i32
    %c0_i32_0 = arith.constant 0 : i32
    %c0_i32_1 = arith.constant 0 : i32
    return %arg0, %c0_i32, %c0_i32_0 : i32, i32, i32
  }
  func.func @transform_1(%arg0: i32) -> (i32, i32) {
    %c0_i32 = arith.constant 0 : i32
    %c0_i32_0 = arith.constant 0 : i32
    %c0_i32_1 = arith.constant 0 : i32
    return %c0_i32, %c0_i32_0 : i32, i32
  }
  func.func @transform_2(%arg0: i32) -> (i32, i32, i32) {
    %c0_i32 = arith.constant 0 : i32
    %c0_i32_0 = arith.constant 0 : i32
    %c0_i32_1 = arith.constant 0 : i32
    return %arg0, %c0_i32, %c0_i32_0 : i32, i32, i32
  }
}

</mosaic_0001>

<llo_original>
// kernel: tpu_custom_call.1
$region0: #{tpu_custom_call.1}
  #allocation0 [shape = 'u32[]', space=smem, size = 0x4, offset = 0x4, fixed_abs, tag = 'smem constant byte address 0x4 - core index']
  #allocation1 [shape = 'u32[144,128]{1,0:T(1,128)}', space=vmem, size = 0x12000, scoped, tag = 'internal scratch']
  %s0 = inlined_call_operand.vmem [shape: f32[4,16,256], index: 0, kind: input, shape index: {}]
  %s1 = inlined_call_operand.vmem [shape: bf16[256,64], index: 1, kind: input, shape index: {}]
  %s2 = inlined_call_operand.hbm [shape: f32[4,32,64], index: 2, kind: output, shape index: {}]
  %s3 = sld [smem:[#allocation0]]
  $region41: #{tpu_custom_call.1} parent=0
    _
  %s5 = ssub.s32 1, %s3
  %s6 = scalar_select 0, %s5, %s3
  $region1: #{tpu_custom_call.1} parent=0
    #allocation2 [shape = 'u8[65536]{0}', space=vmem, size = 0x10000, scoped, tag = 'output window, operand 0']
    #allocation3 [shape = 's32[2]{0}', space=sflag, size = 0x8, scoped, tag = 'scoped memory for tpu_custom_call.1']
    %7 = vsyncpa [#allocation3], 0
    %s8 = scalar_lea.sflag [#allocation3], 1
    %9 = vsyncpa %s8, 0
    loop: start=0, step=1, limit=4
    $region2: #{tpu_custom_call.1} parent=1 // loop_pre_header
      _
    $region3: #{tpu_custom_call.1} parent=1 // loop_header
      %s11 = sphi 0, %s15
      %p12 = scmp.ge.s32.totalorder %s11, 4
      %s21 = sphi 0, %s23
      %s24 = sphi 0, %s21
      %s25 = sphi 0, %s24
      %s41 = sphi 0, %s25
      %s45 = sphi 0, %s45
      %s47 = sphi 0, %s45
      %s48 = sphi 0, %s47
      %s62 = sphi 0, %s48
      %s68 = sphi 0, %s70
      %s71 = sphi 0, %s68
      %s72 = sphi 0, %s71
      %s88 = sphi 0, %s72
    $region4: #{tpu_custom_call.1} parent=1 // loop_header_branch
      %14 = sbr.rel (%p12) target = $region8
    $region5: #{tpu_custom_call.1} parent=1 // loop_body
      %s16 = ssub.s32 %s11, 1
      %s17 = ssub.s32 %s11, 2
      %s18 = sadd.s32 %s11, 1
      %s19 = ssub.s32 %s11, %s18
      %p20 = scmp.eq.s32.totalorder %s19, 0
      %s22 = sadd.s32 %s21, 1
      %s23 = scalar_select %p20, %s21, %s22
      %p26 = pneg %p20
      %p27 = scmp.eq.s32.totalorder %s11, 1
      %p28 = por %p26, %p27
      %p29 = scmp.ne.s32.totalorder %s21, %s24
      %p30 = scmp.eq.s32.totalorder %s11, 0
      %p31 = por %p29, %p30
      %p32 = scmp.ne.s32.totalorder %s21, %s24
      %p33 = scmp.eq.s32.totalorder %s16, 1
      %p34 = por %p32, %p33
      %p35 = scmp.ne.s32.totalorder %s24, %s25
      %p36 = scmp.eq.s32.totalorder %s16, 0
      %p37 = por %p35, %p36
      %p38 = scmp.ne.s32.totalorder %s24, %s25
      %p39 = scmp.eq.s32.totalorder %s17, 1
      %p40 = por %p38, %p39
      %p42 = scmp.ne.s32.totalorder %s25, %s41
      %p43 = scmp.eq.s32.totalorder %s17, 0
      %p44 = por %p42, %p43
      %s46 = sadd.s32 %s45, 1
      %p49 = scmp.eq.s32.totalorder %s11, 1
      %p50 = scmp.ne.s32.totalorder %s45, %s47
      %p51 = scmp.eq.s32.totalorder %s11, 0
      %p52 = por %p50, %p51
      %p53 = scmp.ne.s32.totalorder %s45, %s47
      %p54 = scmp.eq.s32.totalorder %s16, 1
      %p55 = por %p53, %p54
      %p56 = scmp.ne.s32.totalorder %s47, %s48
      %p57 = scmp.eq.s32.totalorder %s16, 0
      %p58 = por %p56, %p57
      %p59 = scmp.ne.s32.totalorder %s47, %s48
      %p60 = scmp.eq.s32.totalorder %s17, 1
      %p61 = por %p59, %p60
      %p63 = scmp.ne.s32.totalorder %s48, %s62
      %p64 = scmp.eq.s32.totalorder %s17, 0
      %p65 = por %p63, %p64
      %s66 = ssub.s32 %s11, %s18
      %p67 = scmp.eq.s32.totalorder %s66, 0
      %s69 = sadd.s32 %s68, 1
      %s70 = scalar_select %p67, %s68, %s69
      %p73 = pneg %p67
      %p74 = scmp.eq.s32.totalorder %s11, 1
      %p75 = por %p73, %p74
      %p76 = scmp.ne.s32.totalorder %s68, %s71
      %p77 = scmp.eq.s32.totalorder %s11, 0
      %p78 = por %p76, %p77
      %p79 = scmp.ne.s32.totalorder %s68, %s71
      %p80 = scmp.eq.s32.totalorder %s16, 1
      %p81 = por %p79, %p80
      %p82 = scmp.ne.s32.totalorder %s71, %s72
      %p83 = scmp.eq.s32.totalorder %s16, 0
      %p84 = por %p82, %p83
      %p85 = scmp.ne.s32.totalorder %s71, %s72
      %p86 = scmp.eq.s32.totalorder %s17, 1
      %p87 = por %p85, %p86
      %p89 = scmp.ne.s32.totalorder %s72, %s88
      %p90 = scmp.eq.s32.totalorder %s17, 0
      %p91 = por %p89, %p90
      %p92 = scmp.le.s32.totalorder 1, %s11
      %p93 = scmp.lt.s32.totalorder %s11, 3
      %p94 = pnand %p92, %p93
      %p95 = pneg %p94
      // Predicated region
      $region9: #{tpu_custom_call.1} parent=5 // pred_check
        _
      $region10: #{tpu_custom_call.1} parent=5 // pred_check_branch
        %97 = sbr.rel (%p94) target = $region12
      $region11: #{tpu_custom_call.1} parent=5 // pred_region
        %s98 = ssub.s32 %s11, 1
        // Predicated region
        $region13: #{tpu_custom_call.1} parent=11 // pred_check
          %p99 = pneg %p58
        $region14: #{tpu_custom_call.1} parent=11 // pred_check_branch
          %101 = sbr.rel (%p99) target = $region16
        $region15: #{tpu_custom_call.1} parent=11 // pred_region
          _
        $region16: #{tpu_custom_call.1} parent=11 // pred_fallthru
          _
      $region12: #{tpu_custom_call.1} parent=5 // pred_fallthru
        _
      %p102 = scmp.lt.s32.totalorder %s11, 2
      // Predicated region
      $region17: #{tpu_custom_call.1} parent=5 // pred_check
        %p103 = pneg %p102
      $region18: #{tpu_custom_call.1} parent=5 // pred_check_branch
        %105 = sbr.rel (%p103) target = $region20
      $region19: #{tpu_custom_call.1} parent=5 // pred_region
        // Predicated region
        $region21: #{tpu_custom_call.1} parent=19 // pred_check
          %p106 = pneg %p31
        $region22: #{tpu_custom_call.1} parent=19 // pred_check_branch
          %108 = sbr.rel (%p106) target = $region24
        $region23: #{tpu_custom_call.1} parent=19 // pred_region
          %s109 = smul.u32 2, %s11
          %p110 = scmp.lt.s32.totalorder %s109, 3
          %s111 = scalar_select %p110, %s109, 3
          %s112 = smul.addr %s111, 4
          %s113 = smul.addr %s112, 8
          %s114 = scalar_lea.vmem %s0, %s113
          %s115 = smul.u32 2, %s11
        $region24: #{tpu_custom_call.1} parent=19 // pred_fallthru
          _
      $region20: #{tpu_custom_call.1} parent=5 // pred_fallthru
        _
      %p116 = scmp.le.s32.totalorder 1, %s11
      %p117 = scmp.lt.s32.totalorder %s11, 3
      %p118 = pnand %p116, %p117
      %p119 = pneg %p118
      // Predicated region
      $region25: #{tpu_custom_call.1} parent=5 // pred_check
        _
      $region26: #{tpu_custom_call.1} parent=5 // pred_check_branch
        %121 = sbr.rel (%p118) target = $region28
      $region27: #{tpu_custom_call.1} parent=5 // pred_region
        %s122 = ssub.s32 %s11, 1
        %s123 = smul.u32 2, %s16
        %p124 = scmp.lt.s32.totalorder %s123, 3
        %s125 = scalar_select %p124, %s123, 3
        %s126 = smul.addr %s125, 4
        %s127 = smul.addr %s126, 8
        %s128 = scalar_lea.vmem %s0, %s127
        %p129 = pneg %p37
        %p130 = pneg %p34
        %p131 = pneg %p58
        %p132 = pneg %p55
        %p133 = pneg %p84
        %p134 = pneg %p81
        %s135 = sand.u32 %s71, 1
        %s136 = scalar_lea.sflag [#allocation3], %s135
        %s137 = sand.u32 %s71, 1
        %s138 = smul.addr %s137, 64
        %s139 = scalar_lea.vmem [#allocation2], %s138
        %s140 = smul.u32 2, %s16
        %p141 = scmp.lt.s32.totalorder %s140, 3
        %s142 = scalar_select %p141, %s140, 3
        %s143 = smul.addr %s142, 4
        %s144 = smul.addr %s143, 8
        %s145 = scalar_lea.vmem %s0, %s144
        %s146 = smul.u32 2, %s16
        %s147 = smul.u32 2, %s16
        %vm149 = vcmask 523264
        %150 = vst.msk [vmem:[%s139] sm:$0xff] %vm149, 0.0
        %151 = vst.msk [vmem:[%s139 + $0x20] sm:$0xff] %vm149, 0.0
        %152 = vst.msk [vmem:[%s139 + $0x18] sm:$0xff] %vm149, 0.0
        %153 = vst.msk [vmem:[%s139 + $0x38] sm:$0xff] %vm149, 0.0
        %v154 = vld [vmem:[%s145] sm:$0xff]
        %v155 = vld [vmem:[%s145 + $0x8] sm:$0xff]
        %v156 = vld [vmem:[%s145 + $0x10] sm:$0xff]
        %v157 = vld [vmem:[%s145 + $0x18] sm:$0xff]
        %v158 = vld [vmem:[%s145 + $0x20] sm:$0xff]
        %v159 = vld [vmem:[%s145 + $0x28] sm:$0xff]
        %v160 = vld [vmem:[%s145 + $0x30] sm:$0xff]
        %v161 = vld [vmem:[%s145 + $0x38] sm:$0xff]
        %v162 = vld [vmem:[%s1] sm:$0xf]
        %v163 = vld [vmem:[%s1 + $0x4] sm:$0xf]
        %v164 = vld [vmem:[%s1 + $0x8] sm:$0xf]
        %v165 = vld [vmem:[%s1 + $0xc] sm:$0xf]
        %v166 = vld [vmem:[%s1 + $0x10] sm:$0xf]
        %v167 = vld [vmem:[%s1 + $0x14] sm:$0xf]
        %v168 = vld [vmem:[%s1 + $0x18] sm:$0xf]
        %v169 = vld [vmem:[%s1 + $0x1c] sm:$0xf]
        %v170 = vld [vmem:[%s1 + $0x20] sm:$0xf]
        %v171 = vld [vmem:[%s1 + $0x24] sm:$0xf]
        %v172 = vld [vmem:[%s1 + $0x28] sm:$0xf]
        %v173 = vld [vmem:[%s1 + $0x2c] sm:$0xf]
        %v174 = vld [vmem:[%s1 + $0x30] sm:$0xf]
        %v175 = vld [vmem:[%s1 + $0x34] sm:$0xf]
        %v176 = vld [vmem:[%s1 + $0x38] sm:$0xf]
        %v177 = vld [vmem:[%s1 + $0x3c] sm:$0xf]
        %v178 = vld [vmem:[%s1 + $0x40] sm:$0xf]
        %v179 = vld [vmem:[%s1 + $0x44] sm:$0xf]
        %v180 = vld [vmem:[%s1 + $0x48] sm:$0xf]
        %v181 = vld [vmem:[%s1 + $0x4c] sm:$0xf]
        %v182 = vld [vmem:[%s1 + $0x50] sm:$0xf]
        %v183 = vld [vmem:[%s1 + $0x54] sm:$0xf]
        %v184 = vld [vmem:[%s1 + $0x58] sm:$0xf]
        %v185 = vld [vmem:[%s1 + $0x5c] sm:$0xf]
        %v186 = vld [vmem:[%s1 + $0x60] sm:$0xf]
        %v187 = vld [vmem:[%s1 + $0x64] sm:$0xf]
        %v188 = vld [vmem:[%s1 + $0x68] sm:$0xf]
        %v189 = vld [vmem:[%s1 + $0x6c] sm:$0xf]
        %v190 = vld [vmem:[%s1 + $0x70] sm:$0xf]
        %v191 = vld [vmem:[%s1 + $0x74] sm:$0xf]
        %v192 = vld [vmem:[%s1 + $0x78] sm:$0xf]
        %v193 = vld [vmem:[%s1 + $0x7c] sm:$0xf]
        %v194 = vpack.c.bf16 %v156, %v154
        %v195 = vpack.c.bf16 %v157, %v155
        %v196 = vpack.c.bf16 %v160, %v158
        %v197 = vpack.c.bf16 %v161, %v159
        %v198 = vunpack.c.l.bf16 %v194
        %v199 = vunpack.c.l.bf16 %v195
        %v200 = vunpack.c.h.bf16 %v194
        %v201 = vunpack.c.h.bf16 %v195
        %v202 = vunpack.c.l.bf16 %v196
        %v203 = vunpack.c.l.bf16 %v197
        %v204 = vunpack.c.h.bf16 %v196
        %v205 = vunpack.c.h.bf16 %v197
        %v206 = vsub.f32 %v154, %v198
        %v207 = vsub.f32 %v155, %v199
        %v208 = vsub.f32 %v156, %v200
        %v209 = vsub.f32 %v157, %v201
        %v210 = vsub.f32 %v158, %v202
        %v211 = vsub.f32 %v159, %v203
        %v212 = vsub.f32 %v160, %v204
        %v213 = vsub.f32 %v161, %v205
        %v214 = vpack.c.bf16 %v208, %v206
        %v215 = vpack.c.bf16 %v209, %v207
        %v216 = vpack.c.bf16 %v212, %v210
        %v217 = vpack.c.bf16 %v213, %v211
        %v218 = vunpack.c.l.bf16 %v214
        %v219 = vunpack.c.l.bf16 %v215
        %v220 = vunpack.c.h.bf16 %v214
        %v221 = vunpack.c.h.bf16 %v215
        %v222 = vunpack.c.l.bf16 %v216
        %v223 = vunpack.c.l.bf16 %v217
        %v224 = vunpack.c.h.bf16 %v216
        %v225 = vunpack.c.h.bf16 %v217
        %v226 = vsub.f32 %v206, %v218
        %v227 = vsub.f32 %v207, %v219
        %v228 = vsub.f32 %v208, %v220
        %v229 = vsub.f32 %v209, %v221
        %v230 = vsub.f32 %v210, %v222
        %v231 = vsub.f32 %v211, %v223
        %v232 = vsub.f32 %v212, %v224
        %v233 = vsub.f32 %v213, %v225
        %v234 = vpack.c.bf16 %v228, %v226
        %v235 = vpack.c.bf16 %v229, %v227
        %v236 = vpack.c.bf16 %v232, %v230
        %v237 = vpack.c.bf16 %v233, %v231
        %v270 = vunpack.c.l.b16 %v162
        %v271 = vunpack.c.l.b16 %v163
        %v272 = vunpack.c.l.b16 %v164
        %v273 = vunpack.c.l.b16 %v165
        %v274 = vunpack.c.l.b16 %v166
        %v275 = vunpack.c.l.b16 %v167
        %v276 = vunpack.c.l.b16 %v168
        %v277 = vunpack.c.l.b16 %v169
        %v278 = vunpack.c.l.b16 %v170
        %v279 = vunpack.c.l.b16 %v171
        %v280 = vunpack.c.l.b16 %v172
        %v281 = vunpack.c.l.b16 %v173
        %v282 = vunpack.c.l.b16 %v174
        %v283 = vunpack.c.l.b16 %v175
        %v284 = vunpack.c.l.b16 %v176
        %v285 = vunpack.c.l.b16 %v177
        %v286 = vunpack.c.l.b16 %v178
        %v287 = vunpack.c.l.b16 %v179
        %v288 = vunpack.c.l.b16 %v180
        %v289 = vunpack.c.l.b16 %v181
        %v290 = vunpack.c.l.b16 %v182
        %v291 = vunpack.c.l.b16 %v183
        %v292 = vunpack.c.l.b16 %v184
        %v293 = vunpack.c.l.b16 %v185
        %v294 = vunpack.c.l.b16 %v186
        %v295 = vunpack.c.l.b16 %v187
        %v296 = vunpack.c.l.b16 %v188
        %v297 = vunpack.c.l.b16 %v189
        %v298 = vunpack.c.l.b16 %v190
        %v299 = vunpack.c.l.b16 %v191
        %v300 = vunpack.c.l.b16 %v192
        %v301 = vunpack.c.l.b16 %v193
        %v302 = vpack.c.b16 %v271, %v270
        %v303 = vpack.c.b16 %v273, %v272
        %v304 = vpack.c.b16 %v275, %v274
        %v305 = vpack.c.b16 %v277, %v276
        %v306 = vpack.c.b16 %v279, %v278
        %v307 = vpack.c.b16 %v281, %v280
        %v308 = vpack.c.b16 %v283, %v282
        %v309 = vpack.c.b16 %v285, %v284
        %v310 = vpack.c.b16 %v287, %v286
        %v311 = vpack.c.b16 %v289, %v288
        %v312 = vpack.c.b16 %v291, %v290
        %v313 = vpack.c.b16 %v293, %v292
        %v314 = vpack.c.b16 %v295, %v294
        %v315 = vpack.c.b16 %v297, %v296
        %v316 = vpack.c.b16 %v299, %v298
        %v317 = vpack.c.b16 %v301, %v300
        %334 = vmatprep.subr.bf16.mxu0 0
        %335 = vmatpush1.bf16.msra.mxu0 %v309
        %336 = vmatprep.subr.bf16.mxu0 0
        %337 = vmatpush1.bf16.msra.mxu0 %v308
        %338 = vmatprep.subr.bf16.mxu0 0
        %339 = vmatpush1.bf16.msra.mxu0 %v307
        %340 = vmatprep.subr.bf16.mxu0 0
        %341 = vmatpush1.bf16.msra.mxu0 %v306
        %342 = vmatprep.subr.bf16.mxu0 0
        %343 = vmatpush1.bf16.msra.mxu0 %v305
        %344 = vmatprep.subr.bf16.mxu0 0
        %345 = vmatpush1.bf16.msra.mxu0 %v304
        %346 = vmatprep.subr.bf16.mxu0 0
        %347 = vmatpush1.bf16.msra.mxu0 %v303
        %348 = vmatprep.subr.bf16.mxu0 0
        %349 = vmatpush1.bf16.msra.mxu0 %v302
        %350 = vmatprep.subr.bf16.mxu0 0
        %351 = vmatpush2.bf16.msra.mxu0 %v317
        %352 = vmatprep.subr.bf16.mxu0 0
        %353 = vmatpush2.bf16.msra.mxu0 %v316
        %354 = vmatprep.subr.bf16.mxu0 0
        %355 = vmatpush2.bf16.msra.mxu0 %v315
        %356 = vmatprep.subr.bf16.mxu0 0
        %357 = vmatpush2.bf16.msra.mxu0 %v314
        %358 = vmatprep.subr.bf16.mxu0 0
        %359 = vmatpush2.bf16.msra.mxu0 %v313
        %360 = vmatprep.subr.bf16.mxu0 0
        %361 = vmatpush2.bf16.msra.mxu0 %v312
        %362 = vmatprep.subr.bf16.mxu0 0
        %363 = vmatpush2.bf16.msra.mxu0 %v311
        %364 = vmatprep.subr.bf16.mxu0 0
        %365 = vmatpush2.bf16.msra.mxu0 %v310
        %366 = vmatprep.mubr.bf16.mxu0 %v215
        %367 = vmatmul.mubr.bf16.gmra.mxu0 %v214
        %v368 = vpop.f32.mrf.mxu0
        %v369 = vadd.f32 0.0, %v368
        %v370 = vpop.f32.mrf.mxu0
        %v371 = vpop.f32.mrf.mxu0
        %v372 = vadd.f32 0.0, %v371
        %v373 = vpop.f32.mrf.mxu0
        %374 = vmatprep.mubr.bf16.mxu0 %v217
        %375 = vmatmul.mubr.bf16.gmra.mxu0 %v216
        %v376 = vpop.f32.mrf.mxu0
        %v377 = vadd.f32 0.0, %v376
        %v378 = vpop.f32.mrf.mxu0
        %v379 = vpop.f32.mrf.mxu0
        %v380 = vadd.f32 0.0, %v379
        %v381 = vpop.f32.mrf.mxu0
        %382 = vdwg.mxu0
        %383 = vmatprep.subr.bf16.mxu0 0
        %384 = vmatpush1.bf16.msra.mxu0 %v309
        %385 = vmatprep.subr.bf16.mxu0 0
        %386 = vmatpush1.bf16.msra.mxu0 %v308
        %387 = vmatprep.subr.bf16.mxu0 0
        %388 = vmatpush1.bf16.msra.mxu0 %v307
        %389 = vmatprep.subr.bf16.mxu0 0
        %390 = vmatpush1.bf16.msra.mxu0 %v306
        %391 = vmatprep.subr.bf16.mxu0 0
        %392 = vmatpush1.bf16.msra.mxu0 %v305
        %393 = vmatprep.subr.bf16.mxu0 0
        %394 = vmatpush1.bf16.msra.mxu0 %v304
        %395 = vmatprep.subr.bf16.mxu0 0
        %396 = vmatpush1.bf16.msra.mxu0 %v303
        %397 = vmatprep.subr.bf16.mxu0 0
        %398 = vmatpush1.bf16.msra.mxu0 %v302
        %399 = vmatprep.subr.bf16.mxu0 0
        %400 = vmatpush2.bf16.msra.mxu0 %v317
        %401 = vmatprep.subr.bf16.mxu0 0
        %402 = vmatpush2.bf16.msra.mxu0 %v316
        %403 = vmatprep.subr.bf16.mxu0 0
        %404 = vmatpush2.bf16.msra.mxu0 %v315
        %405 = vmatprep.subr.bf16.mxu0 0
        %406 = vmatpush2.bf16.msra.mxu0 %v314
        %407 = vmatprep.subr.bf16.mxu0 0
        %408 = vmatpush2.bf16.msra.mxu0 %v313
        %409 = vmatprep.subr.bf16.mxu0 0
        %410 = vmatpush2.bf16.msra.mxu0 %v312
        %411 = vmatprep.subr.bf16.mxu0 0
        %412 = vmatpush2.bf16.msra.mxu0 %v311
        %413 = vmatprep.subr.bf16.mxu0 0
        %414 = vmatpush2.bf16.msra.mxu0 %v310
        %415 = vmatprep.mubr.bf16.mxu0 %v195
        %416 = vmatmul.mubr.bf16.gmra.mxu0 %v194
        %v417 = vpop.f32.mrf.mxu0
        %v418 = vadd.f32 %v369, %v417
        %v419 = vpop.f32.mrf.mxu0
        %v420 = vpop.f32.mrf.mxu0
        %v421 = vadd.f32 %v372, %v420
        %v422 = vpop.f32.mrf.mxu0
        %423 = vmatprep.mubr.bf16.mxu0 %v197
        %424 = vmatmul.mubr.bf16.gmra.mxu0 %v196
        %v425 = vpop.f32.mrf.mxu0
        %v426 = vadd.f32 %v377, %v425
        %v427 = vpop.f32.mrf.mxu0
        %v428 = vpop.f32.mrf.mxu0
        %v429 = vadd.f32 %v380, %v428
        %v430 = vpop.f32.mrf.mxu0
        %431 = vdwg.mxu0
        %432 = vmatprep.subr.bf16.mxu0 0
        %433 = vmatpush1.bf16.msra.mxu0 %v309
        %434 = vmatprep.subr.bf16.mxu0 0
        %435 = vmatpush1.bf16.msra.mxu0 %v308
        %436 = vmatprep.subr.bf16.mxu0 0
        %437 = vmatpush1.bf16.msra.mxu0 %v307
        %438 = vmatprep.subr.bf16.mxu0 0
        %439 = vmatpush1.bf16.msra.mxu0 %v306
        %440 = vmatprep.subr.bf16.mxu0 0
        %441 = vmatpush1.bf16.msra.mxu0 %v305
        %442 = vmatprep.subr.bf16.mxu0 0
        %443 = vmatpush1.bf16.msra.mxu0 %v304
        %444 = vmatprep.subr.bf16.mxu0 0
        %445 = vmatpush1.bf16.msra.mxu0 %v303
        %446 = vmatprep.subr.bf16.mxu0 0
        %447 = vmatpush1.bf16.msra.mxu0 %v302
        %448 = vmatprep.subr.bf16.mxu0 0
        %449 = vmatpush2.bf16.msra.mxu0 %v317
        %450 = vmatprep.subr.bf16.mxu0 0
        %451 = vmatpush2.bf16.msra.mxu0 %v316
        %452 = vmatprep.subr.bf16.mxu0 0
        %453 = vmatpush2.bf16.msra.mxu0 %v315
        %454 = vmatprep.subr.bf16.mxu0 0
        %455 = vmatpush2.bf16.msra.mxu0 %v314
        %456 = vmatprep.subr.bf16.mxu0 0
        %457 = vmatpush2.bf16.msra.mxu0 %v313
        %458 = vmatprep.subr.bf16.mxu0 0
        %459 = vmatpush2.bf16.msra.mxu0 %v312
        %460 = vmatprep.subr.bf16.mxu0 0
        %461 = vmatpush2.bf16.msra.mxu0 %v311
        %462 = vmatprep.subr.bf16.mxu0 0
        %463 = vmatpush2.bf16.msra.mxu0 %v310
        %464 = vmatprep.mubr.bf16.mxu0 %v235
        %465 = vmatmul.mubr.bf16.gmra.mxu0 %v234
        %v466 = vpop.f32.mrf.mxu0
        %v467 = vadd.f32 0.0, %v466
        %v468 = vpop.f32.mrf.mxu0
        %v469 = vpop.f32.mrf.mxu0
        %v470 = vadd.f32 0.0, %v469
        %v471 = vpop.f32.mrf.mxu0
        %472 = vmatprep.mubr.bf16.mxu0 %v237
        %473 = vmatmul.mubr.bf16.gmra.mxu0 %v236
        %v474 = vpop.f32.mrf.mxu0
        %v475 = vadd.f32 0.0, %v474
        %v476 = vpop.f32.mrf.mxu0
        %v477 = vpop.f32.mrf.mxu0
        %v478 = vadd.f32 0.0, %v477
        %v479 = vpop.f32.mrf.mxu0
        %480 = vdwg.mxu0
        %v481 = vadd.f32 %v418, %v467
        %v482 = vadd.f32 %v421, %v470
        %v483 = vadd.f32 %v426, %v475
        %v484 = vadd.f32 %v429, %v478
        %485 = vst.msk [vmem:[%s139 + $0x8] sm:$0xff] %vm149, %v481
        %486 = vst.msk [vmem:[%s139 + $0x10] sm:$0xff] %vm149, %v482
        %487 = vst.msk [vmem:[%s139 + $0x28] sm:$0xff] %vm149, %v483
        %488 = vst.msk [vmem:[%s139 + $0x30] sm:$0xff] %vm149, %v484
        %s489 = sand.u32 %s71, 1
        %s490 = scalar_lea.sflag [#allocation3], %s489
        %s491 = sand.u32 %s71, 1
        %s492 = smul.addr %s491, 64
        %s493 = scalar_lea.vmem [#allocation2], %s492
        // Predicated region
        $region29: #{tpu_custom_call.1} parent=27 // pred_check
          %p494 = pneg %p81
        $region30: #{tpu_custom_call.1} parent=27 // pred_check_branch
          %496 = sbr.rel (%p494) target = $region32
        $region31: #{tpu_custom_call.1} parent=27 // pred_region
          %s497 = smul.u32 2, %s16
          %s499 = ssub.s32 1024, 1024
          %500 = vsyncadd %s490, %s499
          %s501 = smul.addr %s497, 4
          %s502 = smul.addr %s501, 128
          %s503 = scalar_lea.hbm %s2, %s502
          %s504 = sshll.u32 %s493, 4
          %s505 = int_to_ptr.vmem [resolvable:$true] %s504
          %510 = dma.vmem_to_hbm [thread:$0]  %s505, 1024, %s503, %s490, 128, 128, 8
        $region32: #{tpu_custom_call.1} parent=27 // pred_fallthru
          _
      $region28: #{tpu_custom_call.1} parent=5 // pred_fallthru
        _
      %p511 = scmp.le.s32.totalorder 2, %s11
      // Predicated region
      $region33: #{tpu_custom_call.1} parent=5 // pred_check
        %p512 = pneg %p511
      $region34: #{tpu_custom_call.1} parent=5 // pred_check_branch
        %514 = sbr.rel (%p512) target = $region36
      $region35: #{tpu_custom_call.1} parent=5 // pred_region
        %s515 = ssub.s32 %s11, 2
        // Predicated region
        $region37: #{tpu_custom_call.1} parent=35 // pred_check
          %p516 = pneg %p87
        $region38: #{tpu_custom_call.1} parent=35 // pred_check_branch
          %518 = sbr.rel (%p516) target = $region40
        $region39: #{tpu_custom_call.1} parent=35 // pred_region
          %s519 = sand.u32 %s72, 1
          %s520 = scalar_lea.sflag [#allocation3], %s519
          %s521 = sand.u32 %s72, 1
          %s522 = smul.addr %s521, 64
          %s523 = scalar_lea.vmem [#allocation2], %s522
          %524 = dma.done %s520, 1024
        $region40: #{tpu_custom_call.1} parent=35 // pred_fallthru
          _
      $region36: #{tpu_custom_call.1} parent=5 // pred_fallthru
        _
    $region6: #{tpu_custom_call.1} parent=1 // loop_footer
      %s15 = sadd.s32 1, %s11
    $region7: #{tpu_custom_call.1} parent=1 // loop_footer_branch
      %10 = sbr.rel target = $region3
    $region8: #{tpu_custom_call.1} parent=1 // loop_exit
      _
    %525 = vsyncpa [#allocation3], 1
    %s526 = scalar_lea.sflag [#allocation3], 1
    %527 = vsyncpa %s526, 1

</llo_original>
